<compile_context>
chip_gen: v7x
topology: tpu7x:2x2x1
jax: 0.10.0
libtpu: 0.0.40
codegen_flags: <defaults>
</compile_context>

<pallas_src>
import functools

import numpy as np
import jax
import jax.numpy as jnp
from jax.experimental import pallas as pl
from jax.experimental.pallas import tpu as pltpu

QUASI_INF = 1000000000.0


def _round_up(x, m):
    return ((x + m - 1) // m) * m


def cooc_op_kernel(func_ref, arg_ref, cooc_ref, out_ref, *, V, Vp):
    # func_ref : (TB, Vp)   func vectors; flags at lanes V, V+1; zeros beyond V+2
    # arg_ref  : (TB, Vp)   arg vectors; lanes >= V only meet zero columns
    # cooc_ref : (Vp, 3*Vp) fused cooccurrence matrix (VMEM resident across grid)
    # out_ref  : (TB, 3)
    f = func_ref[...]
    a = arg_ref[...]

    # One fused MXU matmul for all three operators: (TB, Vp) x (Vp, 3*Vp).
    t = jnp.dot(f, cooc_ref[...], preferred_element_type=jnp.float32)  # (TB, 3*Vp)

    # Per-operator bilinear value: each 128-aligned lane block reduced against arg.
    cols = []
    for o in range(3):  # static unroll; slice starts are multiples of Vp (>=128)
        blk = t[:, o * Vp:(o + 1) * Vp] * a
        cols.append(jnp.sum(blk, axis=-1, keepdims=True))              # (TB, 1)

    # Op mask from the flag lanes of func (read in-kernel; no extra input).
    arg1 = f[:, V:V + 1]                                               # (TB, 1)
    arg2 = f[:, V + 1:V + 2]                                           # (TB, 1)
    no_arg1 = arg1 * (-QUASI_INF)
    no_arg2 = (1.0 - (1.0 - arg1) * (1.0 - arg2)) * (-QUASI_INF)

    out_ref[...] = jnp.concatenate(
        [cols[0] + no_arg1, cols[1] + no_arg2, cols[2]], axis=-1)      # (TB, 3)


def cooc_op_forward(func, arg, cooccurrences, *, tb=256):
    """JAX wrapper reproducing CoocOpModel.forward via a Pallas TPU kernel."""
    func = jnp.asarray(func, jnp.float32)
    arg = jnp.asarray(arg, jnp.float32)
    cooccurrences = jnp.asarray(cooccurrences, jnp.float32)

    *batch, vp2 = func.shape
    V = vp2 - 2
    B = int(np.prod(batch)) if batch else 1

    # Lane dim padded to a multiple of 128 (covers vocab + the two flag lanes).
    Vp = _round_up(vp2, 128)
    # Batch tile: multiple of 8; small batches collapse to a single tile.
    TB = min(tb, _round_up(max(B, 1), 8))
    B_pad = _round_up(max(B, 1), TB)

    f2 = func.reshape(B, vp2)
    a2 = arg.reshape(B, vp2)
    # Zero-pad lanes to Vp and rows to B_pad (padded rows are sliced away below).
    f_p = jnp.zeros((B_pad, Vp), jnp.float32).at[:B, :vp2].set(f2)
    a_p = jnp.zeros((B_pad, Vp), jnp.float32).at[:B, :vp2].set(a2)

    # Fused cooccurrence matrix: C_big[i, o*Vp + j] = cooccurrences[i, j, o].
    # Rows/cols >= V (including the flag lanes) are zero.
    c_perm = jnp.transpose(cooccurrences, (2, 0, 1))                       # (3, V, V)
    c_pad = jnp.zeros((3, Vp, Vp), jnp.float32).at[:, :V, :V].set(c_perm)
    c_big = jnp.transpose(c_pad, (1, 0, 2)).reshape(Vp, 3 * Vp)            # (Vp, 3*Vp)

    grid = (B_pad // TB,)
    kernel = functools.partial(cooc_op_kernel, V=V, Vp=Vp)

    flops = 2 * B_pad * Vp * (3 * Vp) + 4 * B_pad * Vp
    bytes_accessed = 4 * (2 * B_pad * Vp + Vp * 3 * Vp + B_pad * 3)
    # 2 double-buffered (TB, Vp) inputs + resident (Vp, 3Vp) cooc + output + headroom.
    vmem_need = 4 * (2 * 2 * TB * Vp + 2 * 3 * Vp * Vp + 2 * TB * 3) + (2 << 20)
    vmem_limit = int(min(max(vmem_need, 32 << 20), 96 << 20))

    out = pl.pallas_call(
        kernel,
        out_shape=jax.ShapeDtypeStruct((B_pad, 3), jnp.float32),
        grid=grid,
        in_specs=[
            pl.BlockSpec((TB, Vp), lambda i: (i, 0)),
            pl.BlockSpec((TB, Vp), lambda i: (i, 0)),
            pl.BlockSpec((Vp, 3 * Vp), lambda i: (0, 0)),   # resident across grid
        ],
        out_specs=pl.BlockSpec((TB, 3), lambda i: (i, 0)),
        compiler_params=pltpu.CompilerParams(
            dimension_semantics=("parallel",),
            vmem_limit_bytes=vmem_limit,
        ),
        cost_estimate=pl.CostEstimate(
            flops=flops, transcendentals=0, bytes_accessed=bytes_accessed),
    )(f_p, a_p, c_big)

    # TODO(synk): on v6e/v7x, casting f/a/c_big to bf16 (f32 MXU accumulation)
    # halves DMA bytes and VMEM; kept f32 here to preserve numerical tolerance.
    return out[:B].reshape(*batch, 3)


def reference_forward(func, arg, cooccurrences):
    """Pure-JAX reference mirroring the PyTorch forward exactly."""
    arg1_flag = func[..., -2]
    arg2_flag = func[..., -1]
    no_arg1 = arg1_flag * (-QUASI_INF)
    no_arg2 = (1.0 - (1.0 - arg1_flag) * (1.0 - arg2_flag)) * (-QUASI_INF)
    no_mod = jnp.zeros_like(arg1_flag)
    op_mask = jnp.stack([no_arg1, no_arg2, no_mod], axis=-1)
    f = func[..., :-2]
    a = arg[..., :-2]
    vals = jnp.einsum('...i,ijo,...j->...o', f, cooccurrences, a)
    return vals + op_mask


def _make_inputs(key, batch_dims, V):
    k1, k2, k3, k4, k5 = jax.random.split(key, 5)
    cooccurrences = jax.random.normal(k1, (V, V, 3), dtype=jnp.float32)
    func_vocab = jax.random.normal(k2, batch_dims + (V,), dtype=jnp.float32)
    func_flags = jax.random.bernoulli(k3, 0.5, batch_dims + (2,)).astype(jnp.float32)
    func = jnp.concatenate([func_vocab, func_flags], axis=-1)
    arg_vocab = jax.random.normal(k4, batch_dims + (V,), dtype=jnp.float32)
    arg_flags = jax.random.bernoulli(k5, 0.5, batch_dims + (2,)).astype(jnp.float32)
    arg = jnp.concatenate([arg_vocab, arg_flags], axis=-1)
    return func, arg, cooccurrences


if __name__ == "__main__":
    key = jax.random.PRNGKey(0)
    k_a, k_b = jax.random.split(key)

    # Case 1: V=16, batch (2, 4) -> B=8 (single 8-row tile).
    func, arg, cooc = _make_inputs(k_a, (2, 4), 16)
    out = jax.block_until_ready(cooc_op_forward(func, arg, cooc))
    ref = jax.block_until_ready(reference_forward(func, arg, cooc))
    assert out.shape == (2, 4, 3)
    np.testing.assert_allclose(np.asarray(out), np.asarray(ref), rtol=1e-5, atol=1e-3)

    # Case 2: ragged batch (B=15, not a multiple of 8) and V=20 (padding path).
    func, arg, cooc = _make_inputs(k_b, (3, 5), 20)
    out = jax.block_until_ready(cooc_op_forward(func, arg, cooc))
    ref = jax.block_until_ready(reference_forward(func, arg, cooc))
    assert out.shape == (3, 5, 3)
    np.testing.assert_allclose(np.asarray(out), np.asarray(ref), rtol=1e-5, atol=1e-3)

    print("KERNEL_OK")
</pallas_src>

<mosaic_0001>
module attributes {stable_mosaic.version = 11 : i64} {
  func.func @cooc_op_kernel(%arg0: i32, %arg1: memref<8x128xf32, #tpu.memory_space<vmem>>, %arg2: memref<8x128xf32, #tpu.memory_space<vmem>>, %arg3: memref<128x384xf32, #tpu.memory_space<vmem>>, %arg4: memref<8x3xf32, #tpu.memory_space<vmem>>) attributes {dimension_semantics = [#tpu.dimension_semantics<parallel>], iteration_bounds = array<i64: 1>, scalar_prefetch = 0 : i64, scratch_operands = 0 : i64, tpu.core_type = #tpu.core_type<tc>, window_params = [{transform_indices = @transform_0, window_bounds = array<i64: 8, 128>}, {transform_indices = @transform_1, window_bounds = array<i64: 8, 128>}, {pipeline_mode = #tpu.pipeline_mode<synchronous>, transform_indices = @transform_2, window_bounds = array<i64: 128, 384>}, {transform_indices = @transform_3, window_bounds = array<i64: 8, 3>}]} {
    %c0 = arith.constant 0 : index
    %c0_0 = arith.constant 0 : index
    %0 = vector.load %arg1[%c0, %c0_0] : memref<8x128xf32, #tpu.memory_space<vmem>>, vector<8x128xf32>
    %c0_1 = arith.constant 0 : index
    %c0_2 = arith.constant 0 : index
    %1 = vector.load %arg2[%c0_1, %c0_2] : memref<8x128xf32, #tpu.memory_space<vmem>>, vector<8x128xf32>
    %c0_3 = arith.constant 0 : index
    %c0_4 = arith.constant 0 : index
    %2 = vector.load %arg3[%c0_3, %c0_4] : memref<128x384xf32, #tpu.memory_space<vmem>>, vector<128x384xf32>
    %cst = arith.constant dense<0.000000e+00> : vector<8x384xf32>
    %3 = tpu.matmul %0, %2, %cst {dimension_numbers = #tpu.dot_dimension_numbers<[1], [0], [0], [1], [0, 0, 1, 1], [], []>} : vector<8x128xf32>, vector<128x384xf32>, vector<8x384xf32> -> vector<8x384xf32>
    %4 = vector.extract_strided_slice %3 {offsets = [0, 0], sizes = [8, 128], strides = [1, 1]} : vector<8x384xf32> to vector<8x128xf32>
    %5 = arith.mulf %4, %1 : vector<8x128xf32>
    %cst_5 = arith.constant dense<0.000000e+00> : vector<8xf32>
    %6 = vector.multi_reduction <add>, %5, %cst_5 [1] : vector<8x128xf32> to vector<8xf32>
    %7 = vector.shape_cast %6 : vector<8xf32> to vector<8x1xf32>
    %8 = vector.extract_strided_slice %3 {offsets = [0, 128], sizes = [8, 128], strides = [1, 1]} : vector<8x384xf32> to vector<8x128xf32>
    %9 = arith.mulf %8, %1 : vector<8x128xf32>
    %cst_6 = arith.constant dense<0.000000e+00> : vector<8xf32>
    %10 = vector.multi_reduction <add>, %9, %cst_6 [1] : vector<8x128xf32> to vector<8xf32>
    %11 = vector.shape_cast %10 : vector<8xf32> to vector<8x1xf32>
    %12 = vector.extract_strided_slice %3 {offsets = [0, 256], sizes = [8, 128], strides = [1, 1]} : vector<8x384xf32> to vector<8x128xf32>
    %13 = arith.mulf %12, %1 : vector<8x128xf32>
    %cst_7 = arith.constant dense<0.000000e+00> : vector<8xf32>
    %14 = vector.multi_reduction <add>, %13, %cst_7 [1] : vector<8x128xf32> to vector<8xf32>
    %15 = vector.shape_cast %14 : vector<8xf32> to vector<8x1xf32>
    %16 = vector.extract_strided_slice %0 {offsets = [0, 16], sizes = [8, 1], strides = [1, 1]} : vector<8x128xf32> to vector<8x1xf32>
    %17 = vector.extract_strided_slice %0 {offsets = [0, 17], sizes = [8, 1], strides = [1, 1]} : vector<8x128xf32> to vector<8x1xf32>
    %cst_8 = arith.constant -1.000000e+09 : f32
    %18 = vector.broadcast %cst_8 : f32 to vector<8x1xf32>
    %19 = arith.mulf %16, %18 : vector<8x1xf32>
    %cst_9 = arith.constant 1.000000e+00 : f32
    %20 = vector.broadcast %cst_9 : f32 to vector<8x1xf32>
    %21 = arith.subf %20, %16 : vector<8x1xf32>
    %cst_10 = arith.constant 1.000000e+00 : f32
    %22 = vector.broadcast %cst_10 : f32 to vector<8x1xf32>
    %23 = arith.subf %22, %17 : vector<8x1xf32>
    %24 = arith.mulf %21, %23 : vector<8x1xf32>
    %cst_11 = arith.constant 1.000000e+00 : f32
    %25 = vector.broadcast %cst_11 : f32 to vector<8x1xf32>
    %26 = arith.subf %25, %24 : vector<8x1xf32>
    %cst_12 = arith.constant -1.000000e+09 : f32
    %27 = vector.broadcast %cst_12 : f32 to vector<8x1xf32>
    %28 = arith.mulf %26, %27 : vector<8x1xf32>
    %29 = arith.addf %7, %19 : vector<8x1xf32>
    %30 = arith.addf %11, %28 : vector<8x1xf32>
    %31 = tpu.concatenate %29, %30, %15 in 1 : vector<8x1xf32>, vector<8x1xf32>, vector<8x1xf32> -> vector<8x3xf32>
    %c0_13 = arith.constant 0 : index
    %c0_14 = arith.constant 0 : index
    %32 = vector.load %arg4[%c0_13, %c0_14] : memref<8x3xf32, #tpu.memory_space<vmem>>, vector<8x3xf32>
    tpu.vector_store %arg4[%c0_13, %c0_14], %31 {strides = array<i32>} : memref<8x3xf32, #tpu.memory_space<vmem>>, vector<8x3xf32>,
    return
  }
  func.func @transform_0(%arg0: i32) -> (i32, i32) {
    %c0_i32 = arith.constant 0 : i32
    %c0_i32_0 = arith.constant 0 : i32
    return %arg0, %c0_i32 : i32, i32
  }
  func.func @transform_1(%arg0: i32) -> (i32, i32) {
    %c0_i32 = arith.constant 0 : i32
    %c0_i32_0 = arith.constant 0 : i32
    return %arg0, %c0_i32 : i32, i32
  }
  func.func @transform_2(%arg0: i32) -> (i32, i32) {
    %c0_i32 = arith.constant 0 : i32
    %c0_i32_0 = arith.constant 0 : i32
    %c0_i32_1 = arith.constant 0 : i32
    return %c0_i32, %c0_i32_0 : i32, i32
  }
  func.func @transform_3(%arg0: i32) -> (i32, i32) {
    %c0_i32 = arith.constant 0 : i32
    %c0_i32_0 = arith.constant 0 : i32
    return %arg0, %c0_i32 : i32, i32
  }
}

</mosaic_0001>

<llo_original>
// kernel: tpu_custom_call.1
$region0: #{tpu_custom_call.1}
  #allocation0 [shape = 'u32[]', space=smem, size = 0x4, offset = 0x4, fixed_abs, tag = 'smem constant byte address 0x4 - core index']
  #allocation1 [shape = 'u32[144,128]{1,0:T(1,128)}', space=vmem, size = 0x12000, scoped, tag = 'internal scratch']
  %s0 = inlined_call_operand.hbm [shape: f32[8,128], index: 0, kind: input, shape index: {}]
  %s1 = inlined_call_operand.hbm [shape: f32[8,128], index: 1, kind: input, shape index: {}]
  %s2 = inlined_call_operand.hbm [shape: f32[128,384], index: 2, kind: input, shape index: {}]
  %s3 = inlined_call_operand.vmem [shape: f32[8,3], index: 3, kind: output, shape index: {}]
  %s4 = sld [smem:[#allocation0]]
  $region34: #{tpu_custom_call.1} parent=0
    _
  %s6 = ssub.s32 1, %s4
  %s7 = scalar_select 0, %s6, %s4
  $region1: #{tpu_custom_call.1} parent=0
    #allocation2 [shape = 'u8[4096]{0}', space=vmem, size = 0x1000, scoped, tag = 'input window, operand 0, single buffered']
    #allocation3 [shape = 's32[1]{0}', space=sflag, size = 0x4, scoped, tag = 'scoped memory for tpu_custom_call.1']
    #allocation4 [shape = 'u8[4096]{0}', space=vmem, size = 0x1000, scoped, tag = 'input window, operand 1, single buffered']
    #allocation5 [shape = 's32[1]{0}', space=sflag, size = 0x4, scoped, tag = 'scoped memory for tpu_custom_call.1']
    #allocation6 [shape = 'u8[196608]{0}', space=vmem, size = 0x30000, scoped, tag = 'input window, operand 2, single buffered']
    %8 = vsyncpa [#allocation3], 0
    %9 = vsyncpa [#allocation5], 0
    // Predicated region
    $region2: #{tpu_custom_call.1} parent=1 // pred_check
      _
    $region3: #{tpu_custom_call.1} parent=1 // pred_check_branch
      %11 = sbr.rel (0) target = $region5
    $region4: #{tpu_custom_call.1} parent=1 // pred_region
      %s13 = ssub.s32 128, 128
      %14 = vsyncadd [#allocation3], %s13
      %s16 = sshll.u32 [#allocation2], 4
      %s17 = int_to_ptr.vmem [resolvable:$true] %s16
      %19 = dma.hbm_to_vmem [thread:$0]  %s0, 128, %s17, [#allocation3]
    $region5: #{tpu_custom_call.1} parent=1 // pred_fallthru
      _
    // Predicated region
    $region6: #{tpu_custom_call.1} parent=1 // pred_check
      _
    $region7: #{tpu_custom_call.1} parent=1 // pred_check_branch
      %21 = sbr.rel (0) target = $region9
    $region8: #{tpu_custom_call.1} parent=1 // pred_region
      %s23 = ssub.s32 128, 128
      %24 = vsyncadd [#allocation5], %s23
      %s26 = sshll.u32 [#allocation4], 4
      %s27 = int_to_ptr.vmem [resolvable:$true] %s26
      %29 = dma.hbm_to_vmem [thread:$0]  %s1, 128, %s27, [#allocation5]
    $region9: #{tpu_custom_call.1} parent=1 // pred_fallthru
      _
    // Predicated region
    $region10: #{tpu_custom_call.1} parent=1 // pred_check
      _
    $region11: #{tpu_custom_call.1} parent=1 // pred_check_branch
      %31 = sbr.rel (0) target = $region13
    $region12: #{tpu_custom_call.1} parent=1 // pred_region
      %s33 = ssub.s32 6144, 6144
      %34 = vsyncadd [#allocation5], %s33
      %s35 = sshll.u32 [#allocation6], 4
      %s36 = int_to_ptr.vmem [resolvable:$true] %s35
      %41 = dma.hbm_to_vmem [thread:$0]  %s2, 6144, %s36, [#allocation5], 384, 384, 24
    $region13: #{tpu_custom_call.1} parent=1 // pred_fallthru
      _
    // Predicated region
    $region14: #{tpu_custom_call.1} parent=1 // pred_check
      _
    $region15: #{tpu_custom_call.1} parent=1 // pred_check_branch
      %43 = sbr.rel (0) target = $region17
    $region16: #{tpu_custom_call.1} parent=1 // pred_region
      %44 = dma.done [#allocation3], 128
    $region17: #{tpu_custom_call.1} parent=1 // pred_fallthru
      _
    // Predicated region
    $region18: #{tpu_custom_call.1} parent=1 // pred_check
      _
    $region19: #{tpu_custom_call.1} parent=1 // pred_check_branch
      %46 = sbr.rel (0) target = $region21
    $region20: #{tpu_custom_call.1} parent=1 // pred_region
      %47 = dma.done [#allocation5], 128
    $region21: #{tpu_custom_call.1} parent=1 // pred_fallthru
      _
    // Predicated region
    $region22: #{tpu_custom_call.1} parent=1 // pred_check
      _
    $region23: #{tpu_custom_call.1} parent=1 // pred_check_branch
      %49 = sbr.rel (0) target = $region25
    $region24: #{tpu_custom_call.1} parent=1 // pred_region
      %50 = dma.done [#allocation5], 6144
    $region25: #{tpu_custom_call.1} parent=1 // pred_fallthru
      _
    %v51 = vld [vmem:[#allocation2] sm:$0xff]
    %v52 = vld [vmem:[#allocation4] sm:$0xff]
    %v53 = vld [vmem:[#allocation6] sm:$0xff]
    %v54 = vld [vmem:[#allocation6 + $0x8] sm:$0xff]
    %v55 = vld [vmem:[#allocation6 + $0x10] sm:$0xff]
    %v56 = vld [vmem:[#allocation6 + $0x18] sm:$0xff]
    %v57 = vld [vmem:[#allocation6 + $0x20] sm:$0xff]
    %v58 = vld [vmem:[#allocation6 + $0x28] sm:$0xff]
    %v59 = vld [vmem:[#allocation6 + $0x30] sm:$0xff]
    %v60 = vld [vmem:[#allocation6 + $0x38] sm:$0xff]
    %v61 = vld [vmem:[#allocation6 + $0x40] sm:$0xff]
    %v62 = vld [vmem:[#allocation6 + $0x48] sm:$0xff]
    %v63 = vld [vmem:[#allocation6 + $0x50] sm:$0xff]
    %v64 = vld [vmem:[#allocation6 + $0x58] sm:$0xff]
    %v65 = vld [vmem:[#allocation6 + $0x60] sm:$0xff]
    %v66 = vld [vmem:[#allocation6 + $0x68] sm:$0xff]
    %v67 = vld [vmem:[#allocation6 + $0x70] sm:$0xff]
    %v68 = vld [vmem:[#allocation6 + $0x78] sm:$0xff]
    %v69 = vld [vmem:[#allocation6 + $0x80] sm:$0xff]
    %v70 = vld [vmem:[#allocation6 + $0x88] sm:$0xff]
    %v71 = vld [vmem:[#allocation6 + $0x90] sm:$0xff]
    %v72 = vld [vmem:[#allocation6 + $0x98] sm:$0xff]
    %v73 = vld [vmem:[#allocation6 + $0xa0] sm:$0xff]
    %v74 = vld [vmem:[#allocation6 + $0xa8] sm:$0xff]
    %v75 = vld [vmem:[#allocation6 + $0xb0] sm:$0xff]
    %v76 = vld [vmem:[#allocation6 + $0xb8] sm:$0xff]
    %v77 = vld [vmem:[#allocation6 + $0xc0] sm:$0xff]
    %v78 = vld [vmem:[#allocation6 + $0xc8] sm:$0xff]
    %v79 = vld [vmem:[#allocation6 + $0xd0] sm:$0xff]
    %v80 = vld [vmem:[#allocation6 + $0xd8] sm:$0xff]
    %v81 = vld [vmem:[#allocation6 + $0xe0] sm:$0xff]
    %v82 = vld [vmem:[#allocation6 + $0xe8] sm:$0xff]
    %v83 = vld [vmem:[#allocation6 + $0xf0] sm:$0xff]
    %v84 = vld [vmem:[#allocation6 + $0xf8] sm:$0xff]
    %v85 = vld [vmem:[#allocation6 + $0x100] sm:$0xff]
    %v86 = vld [vmem:[#allocation6 + $0x108] sm:$0xff]
    %v87 = vld [vmem:[#allocation6 + $0x110] sm:$0xff]
    %v88 = vld [vmem:[#allocation6 + $0x118] sm:$0xff]
    %v89 = vld [vmem:[#allocation6 + $0x120] sm:$0xff]
    %v90 = vld [vmem:[#allocation6 + $0x128] sm:$0xff]
    %v91 = vld [vmem:[#allocation6 + $0x130] sm:$0xff]
    %v92 = vld [vmem:[#allocation6 + $0x138] sm:$0xff]
    %v93 = vld [vmem:[#allocation6 + $0x140] sm:$0xff]
    %v94 = vld [vmem:[#allocation6 + $0x148] sm:$0xff]
    %v95 = vld [vmem:[#allocation6 + $0x150] sm:$0xff]
    %v96 = vld [vmem:[#allocation6 + $0x158] sm:$0xff]
    %v97 = vld [vmem:[#allocation6 + $0x160] sm:$0xff]
    %v98 = vld [vmem:[#allocation6 + $0x168] sm:$0xff]
    %v99 = vld [vmem:[#allocation6 + $0x170] sm:$0xff]
    %v100 = vld [vmem:[#allocation6 + $0x178] sm:$0xff]
    %101 = vmatprep.subr.mxu0 %v54
    %102 = vmatpush1.msra.mxu0 %v53
    %103 = vmatprep.subr.mxu0 %v57
    %104 = vmatpush1.msra.mxu0 %v56
    %105 = vmatprep.subr.mxu0 %v60
    %106 = vmatpush1.msra.mxu0 %v59
    %107 = vmatprep.subr.mxu0 %v63
    %108 = vmatpush1.msra.mxu0 %v62
    %109 = vmatprep.subr.mxu0 %v66
    %110 = vmatpush1.msra.mxu0 %v65
    %111 = vmatprep.subr.mxu0 %v69
    %112 = vmatpush1.msra.mxu0 %v68
    %113 = vmatprep.subr.mxu0 %v72
    %114 = vmatpush1.msra.mxu0 %v71
    %115 = vmatprep.subr.mxu0 %v75
    %116 = vmatpush1.msra.mxu0 %v74
    %117 = vmatprep.subr.mxu0 %v78
    %118 = vmatpush1.msra.mxu0 %v77
    %119 = vmatprep.subr.mxu0 %v81
    %120 = vmatpush1.msra.mxu0 %v80
    %121 = vmatprep.subr.mxu0 %v84
    %122 = vmatpush1.msra.mxu0 %v83
    %123 = vmatprep.subr.mxu0 %v87
    %124 = vmatpush1.msra.mxu0 %v86
    %125 = vmatprep.subr.mxu0 %v90
    %126 = vmatpush1.msra.mxu0 %v89
    %127 = vmatprep.subr.mxu0 %v93
    %128 = vmatpush1.msra.mxu0 %v92
    %129 = vmatprep.subr.mxu0 %v96
    %130 = vmatpush1.msra.mxu0 %v95
    %131 = vmatprep.subr.mxu0 %v99
    %132 = vmatpush1.msra.mxu0 %v98
    %133 = vmatprep.subr.mxu0 0.0
    %134 = vmatpush1.msra.mxu0 0.0
    %135 = vmatprep.subr.mxu0 0.0
    %136 = vmatpush1.msra.mxu0 0.0
    %137 = vmatprep.subr.mxu0 0.0
    %138 = vmatpush1.msra.mxu0 0.0
    %139 = vmatprep.subr.mxu0 0.0
    %140 = vmatpush1.msra.mxu0 0.0
    %141 = vmatprep.subr.mxu0 0.0
    %142 = vmatpush1.msra.mxu0 0.0
    %143 = vmatprep.subr.mxu0 0.0
    %144 = vmatpush1.msra.mxu0 0.0
    %145 = vmatprep.subr.mxu0 0.0
    %146 = vmatpush1.msra.mxu0 0.0
    %147 = vmatprep.subr.mxu0 0.0
    %148 = vmatpush1.msra.mxu0 0.0
    %149 = vmatprep.subr.mxu0 0.0
    %150 = vmatpush1.msra.mxu0 0.0
    %151 = vmatprep.subr.mxu0 0.0
    %152 = vmatpush1.msra.mxu0 0.0
    %153 = vmatprep.subr.mxu0 0.0
    %154 = vmatpush1.msra.mxu0 0.0
    %155 = vmatprep.subr.mxu0 0.0
    %156 = vmatpush1.msra.mxu0 0.0
    %157 = vmatprep.subr.mxu0 0.0
    %158 = vmatpush1.msra.mxu0 0.0
    %159 = vmatprep.subr.mxu0 0.0
    %160 = vmatpush1.msra.mxu0 0.0
    %161 = vmatprep.subr.mxu0 0.0
    %162 = vmatpush1.msra.mxu0 0.0
    %163 = vmatprep.subr.mxu0 0.0
    %164 = vmatpush1.msra.mxu0 0.0
    %165 = vmatprep.mubr.f32.mxu0 0.0
    %166 = vmatmul.mubr.f32.gmra.mrb[0].mxu0 %v51
    %v167 = vpop.f32.mrb[0].mxu0
    %v168 = vadd.f32 0.0, %v167
    %v169 = vpop.f32.mrb[0].mxu0
    %v170 = vadd.f32 0.0, %v169
    %171 = vdwg.mxu0
    %172 = vmatprep.subr.mxu0 0.0
    %173 = vmatpush1.msra.mxu0 %v55
    %174 = vmatprep.subr.mxu0 0.0
    %175 = vmatpush1.msra.mxu0 %v58
    %176 = vmatprep.subr.mxu0 0.0
    %177 = vmatpush1.msra.mxu0 %v61
    %178 = vmatprep.subr.mxu0 0.0
    %179 = vmatpush1.msra.mxu0 %v64
    %180 = vmatprep.subr.mxu0 0.0
    %181 = vmatpush1.msra.mxu0 %v67
    %182 = vmatprep.subr.mxu0 0.0
    %183 = vmatpush1.msra.mxu0 %v70
    %184 = vmatprep.subr.mxu0 0.0
    %185 = vmatpush1.msra.mxu0 %v73
    %186 = vmatprep.subr.mxu0 0.0
    %187 = vmatpush1.msra.mxu0 %v76
    %188 = vmatprep.subr.mxu0 0.0
    %189 = vmatpush1.msra.mxu0 %v79
    %190 = vmatprep.subr.mxu0 0.0
    %191 = vmatpush1.msra.mxu0 %v82
    %192 = vmatprep.subr.mxu0 0.0
    %193 = vmatpush1.msra.mxu0 %v85
    %194 = vmatprep.subr.mxu0 0.0
    %195 = vmatpush1.msra.mxu0 %v88
    %196 = vmatprep.subr.mxu0 0.0
    %197 = vmatpush1.msra.mxu0 %v91
    %198 = vmatprep.subr.mxu0 0.0
    %199 = vmatpush1.msra.mxu0 %v94
    %200 = vmatprep.subr.mxu0 0.0
    %201 = vmatpush1.msra.mxu0 %v97
    %202 = vmatprep.subr.mxu0 0.0
    %203 = vmatpush1.msra.mxu0 %v100
    %204 = vmatprep.subr.mxu0 0.0
    %205 = vmatpush1.msra.mxu0 0.0
    %206 = vmatprep.subr.mxu0 0.0
    %207 = vmatpush1.msra.mxu0 0.0
    %208 = vmatprep.subr.mxu0 0.0
    %209 = vmatpush1.msra.mxu0 0.0
    %210 = vmatprep.subr.mxu0 0.0
    %211 = vmatpush1.msra.mxu0 0.0
    %212 = vmatprep.subr.mxu0 0.0
    %213 = vmatpush1.msra.mxu0 0.0
    %214 = vmatprep.subr.mxu0 0.0
    %215 = vmatpush1.msra.mxu0 0.0
    %216 = vmatprep.subr.mxu0 0.0
    %217 = vmatpush1.msra.mxu0 0.0
    %218 = vmatprep.subr.mxu0 0.0
    %219 = vmatpush1.msra.mxu0 0.0
    %220 = vmatprep.subr.mxu0 0.0
    %221 = vmatpush1.msra.mxu0 0.0
    %222 = vmatprep.subr.mxu0 0.0
    %223 = vmatpush1.msra.mxu0 0.0
    %224 = vmatprep.subr.mxu0 0.0
    %225 = vmatpush1.msra.mxu0 0.0
    %226 = vmatprep.subr.mxu0 0.0
    %227 = vmatpush1.msra.mxu0 0.0
    %228 = vmatprep.subr.mxu0 0.0
    %229 = vmatpush1.msra.mxu0 0.0
    %230 = vmatprep.subr.mxu0 0.0
    %231 = vmatpush1.msra.mxu0 0.0
    %232 = vmatprep.subr.mxu0 0.0
    %233 = vmatpush1.msra.mxu0 0.0
    %234 = vmatprep.subr.mxu0 0.0
    %235 = vmatpush1.msra.mxu0 0.0
    %236 = vmatprep.mubr.f32.mxu0 0.0
    %237 = vmatmul.mubr.f32.gmra.mrb[0].mxu0 %v51
    %v238 = vpop.f32.mrb[0].mxu0
    %v239 = vadd.f32 0.0, %v238
    %v240 = vpop.f32.mrb[0].mxu0
    %241 = vdwg.mxu0
    %v242 = vmul.f32 %v168, %v52
    %243 = vadd.xlane.f32.xlu0 %v242
    %v244 = vpop.xlane.xlu0 %243
    %v245 = vmul.f32 %v170, %v52
    %246 = vadd.xlane.f32.xlu0 %v245
    %v247 = vpop.xlane.xlu0 %246
    %v248 = vmul.f32 %v239, %v52
    %249 = vadd.xlane.f32.xlu0 %v248
    %v250 = vpop.xlane.xlu0 %249
    %v251 = vmul.f32 %v51, -1e+09
    %v252 = vsub.f32 1.0, %v51
    %254 = vrot.lane.b32.xlu0 %v252, 127
    %v255 = vpop.permute.xlu0 %254
    %v257 = vmul.f32 %v252, %v255
    %v258 = vsub.f32 1.0, %v257
    %v259 = vmul.f32 %v258, -1e+09
    %v260 = vadd.f32 %v244, %v251
    %v261 = vadd.f32 %v247, %v259
    %263 = vrot.lane.b32.xlu0 %v260, 112
    %v264 = vpop.permute.xlu0 %263
    %267 = vrot.lane.b32.xlu0 %v261, 113
    %v268 = vpop.permute.xlu0 %267
    %vm270 = vcmask 7168
    %v271 = vsel %vm270, %v264, %v268
    %vm272 = vcmask 15360
    %v273 = vsel %vm272, %v271, %v250
    %vm274 = vcmask 23552
    %275 = vst.msk [vmem:[%s3] sm:$0xff] %vm274, %v273
    // Predicated region
    $region26: #{tpu_custom_call.1} parent=1 // pred_check
      _
    $region27: #{tpu_custom_call.1} parent=1 // pred_check_branch
      %277 = sbr.rel (0) target = $region29
    $region28: #{tpu_custom_call.1} parent=1 // pred_region
      _
    $region29: #{tpu_custom_call.1} parent=1 // pred_fallthru
      _
    // Predicated region
    $region30: #{tpu_custom_call.1} parent=1 // pred_check
      _
    $region31: #{tpu_custom_call.1} parent=1 // pred_check_branch
      %279 = sbr.rel (0) target = $region33
    $region32: #{tpu_custom_call.1} parent=1 // pred_region
      _
    $region33: #{tpu_custom_call.1} parent=1 // pred_fallthru
      _
    %280 = vsyncpa [#allocation3], 1
    %281 = vsyncpa [#allocation5], 1

</llo_original>
